<compile_context>
chip_gen: v6e
topology: v6e:2x2x1
jax: 0.10.0
libtpu: 0.0.40
codegen_flags: <defaults>
</compile_context>

<pallas_src>
import jax
import jax.numpy as jnp
from jax.experimental import pallas as pl
from jax.experimental.pallas import tpu as pltpu


def _pos_enc_kernel(pe_ref, x_ref, o_ref):
    # pe_ref: (1, L) block (constant index -> fetched once and kept resident)
    # x_ref / o_ref: (TB, L) block of batch rows
    o_ref[...] = x_ref[...] + pe_ref[...]


def _chip_tuning():
    """Per-generation (target_block_bytes, vmem_limit_bytes, num_tensorcores)."""
    target = 2 * 1024 * 1024
    vmem_limit = 32 * 1024 * 1024
    num_tc = 1
    try:
        kind = jax.devices()[0].device_kind.lower()
    except Exception:  # pragma: no cover - defensive, fall back to safe defaults
        kind = ""
    if "v7" in kind:
        # 3.2 TB/s HBM: use big blocks so the ~0.35 us/step overhead is <10%,
        # but physical VMEM is only 64 MiB -> cap the scoped limit at 48 MiB.
        target = 8 * 1024 * 1024
        vmem_limit = 48 * 1024 * 1024
        num_tc = 2
    elif "v6" in kind:
        # ~1.4 TB/s HBM, 128 MiB physical VMEM.
        target = 4 * 1024 * 1024
        vmem_limit = 64 * 1024 * 1024
    elif "v5" in kind:
        target = 2 * 1024 * 1024
        vmem_limit = 32 * 1024 * 1024
    return target, vmem_limit, num_tc


def _sublane_multiple(dtype):
    """Sublane packing multiple: 8 for 32-bit, 16 for bf16, 32 for int8/fp8."""
    itemsize = jnp.dtype(dtype).itemsize
    return max(8, 32 // max(1, itemsize))


def _choose_batch_tile(batch, row_bytes, *, target_block_bytes, num_tc, sublane):
    """Pick how many batch rows (TB) go into one (TB, L) block.

    Constraints:
      * TB is a multiple of the (dtype-aware) sublane tile, or the full batch.
      * per-block footprint ~target_block_bytes so double-buffered inputs+output
        stay inside scoped VMEM.
      * v7x (2 TensorCores): prefer an even number of grid steps so the
        "parallel" batch axis shards evenly; never force a split on single-TC
        chips when the whole batch fits in one block.
    """
    tb = max(1, int(target_block_bytes // max(1, row_bytes)))

    if tb >= batch:
        # Whole batch fits comfortably in a single block.
        if num_tc >= 2 and batch >= 2 * sublane:
            half = (batch // 2 // sublane) * sublane
            if half > 0 and pl.cdiv(batch, half) == 2:
                return int(half)  # exactly 2 balanced steps for the 2 TCs
        return int(batch)         # single full-extent block (single-TC or tiny B)

    # Tiled path: multiple grid steps are needed anyway.
    if tb >= sublane:
        tb = (tb // sublane) * sublane
    elif batch >= sublane:
        tb = sublane
    else:
        tb = batch

    if num_tc >= 2 and tb > sublane and pl.cdiv(batch, tb) % 2 == 1:
        # Nudge TB down (bounded) to make the step count even for the 2 TCs.
        cand = tb
        floor = max(sublane, tb // 2)
        while cand - sublane >= floor:
            cand -= sublane
            if pl.cdiv(batch, cand) % 2 == 0:
                tb = cand
                break
    return int(tb)


def positional_encoding_forward(pos_encoding, x):
    """pos_encoding: (N, D), x: (B, N, D). Returns pos_encoding + x (broadcast over B)."""
    B, N, D = x.shape
    assert pos_encoding.shape == (N, D), (pos_encoding.shape, (N, D))

    # Match PyTorch promotion semantics (e.g. f32 param + bf16 activation -> f32).
    out_dtype = jnp.result_type(pos_encoding.dtype, x.dtype)

    L = N * D
    itemsize = jnp.dtype(out_dtype).itemsize
    # Lane-dense views (free reshapes for contiguous row-major arrays).
    x2 = x.astype(out_dtype).reshape(B, L)
    pe2 = pos_encoding.astype(out_dtype).reshape(1, L)

    target_block_bytes, vmem_limit_bytes, num_tc = _chip_tuning()
    sublane = _sublane_multiple(out_dtype)
    tb = _choose_batch_tile(
        B, L * itemsize,
        target_block_bytes=target_block_bytes,
        num_tc=num_tc,
        sublane=sublane,
    )
    grid = (pl.cdiv(B, tb),)

    out2 = pl.pallas_call(
        _pos_enc_kernel,
        out_shape=jax.ShapeDtypeStruct((B, L), out_dtype),
        grid=grid,
        in_specs=[
            # positional encoding: constant block index -> DMA'd once, reused
            pl.BlockSpec((1, L), lambda b: (0, 0)),
            # x: TB batch rows per grid step
            pl.BlockSpec((tb, L), lambda b: (b, 0)),
        ],
        out_specs=pl.BlockSpec((tb, L), lambda b: (b, 0)),
        # Alias x (input index 1) to the output: in-place update when x is donated.
        input_output_aliases={1: 0},
        compiler_params=pltpu.CompilerParams(
            dimension_semantics=("parallel",),
            vmem_limit_bytes=vmem_limit_bytes,
        ),
    )(pe2, x2)

    return out2.reshape(B, N, D)


class PositionalEncodingPallas:
    def __init__(self, img_size=16, patch_size=8, embedding_dim=32,
                 key=None, dtype=jnp.float32):
        self.img_size = img_size
        self.patch_size = patch_size
        self.embedding_dim = embedding_dim
        n_tokens = (img_size // patch_size) ** 2 + 1
        if key is None:
            key = jax.random.PRNGKey(0)
        # deterministic init, mirrors torch.randn((N, D))
        self.positional_encoding = jax.random.normal(
            key, (n_tokens, embedding_dim), dtype=dtype
        )

    def __call__(self, x):
        return positional_encoding_forward(self.positional_encoding, x)


if __name__ == "__main__":
    key = jax.random.PRNGKey(0)
    k_param, k_x, k_x2, k_x3 = jax.random.split(key, 4)

    # Small shapes consistent with the module: img_size=16, patch_size=8,
    # embedding_dim=32 -> N = (16//8)**2 + 1 = 5 tokens.
    module = PositionalEncodingPallas(img_size=16, patch_size=8, embedding_dim=32,
                                      key=k_param)
    N, D = module.positional_encoding.shape

    # Check 1: tiny batch (single full-extent block on single-TC chips).
    B = 2
    x = jax.random.normal(k_x, (B, N, D), dtype=jnp.float32)
    out = jax.block_until_ready(module(x))
    ref = module.positional_encoding[None, :, :] + x
    assert out.shape == (B, N, D)
    assert out.dtype == ref.dtype
    assert jnp.allclose(out, ref, atol=1e-6), "mismatch vs reference (B=2, f32)"

    # Check 2: larger batch (exercises the tile chooser / parallel grid path).
    B2 = 32
    x2 = jax.random.normal(k_x2, (B2, N, D), dtype=jnp.float32)
    out2 = jax.block_until_ready(module(x2))
    ref2 = module.positional_encoding[None, :, :] + x2
    assert out2.shape == (B2, N, D)
    assert jnp.allclose(out2, ref2, atol=1e-6), "mismatch vs reference (B=32, f32)"

    # Check 3: mixed dtype (bf16 activation + f32 param) -> f32 output, matching
    # PyTorch's promotion semantics.
    B3 = 16
    x3 = jax.random.normal(k_x3, (B3, N, D), dtype=jnp.bfloat16)
    out3 = jax.block_until_ready(module(x3))
    ref3 = module.positional_encoding[None, :, :] + x3  # promotes to f32
    assert out3.shape == (B3, N, D)
    assert out3.dtype == jnp.float32
    assert jnp.allclose(out3, ref3, atol=1e-6), "mismatch vs reference (B=16, bf16)"

    print("KERNEL_OK")
</pallas_src>

<mosaic_0001>
module attributes {stable_mosaic.version = 11 : i64} {
  func.func @_pos_enc_kernel(%arg0: i32, %arg1: memref<1x160xf32, #tpu.memory_space<vmem>>, %arg2: memref<2x160xf32, #tpu.memory_space<vmem>>, %arg3: memref<2x160xf32, #tpu.memory_space<vmem>>) attributes {dimension_semantics = [#tpu.dimension_semantics<parallel>], iteration_bounds = array<i64: 1>, scalar_prefetch = 0 : i64, scratch_operands = 0 : i64, tpu.core_type = #tpu.core_type<tc>, window_params = [{pipeline_mode = #tpu.pipeline_mode<synchronous>, transform_indices = @transform_0, window_bounds = array<i64: 1, 160>}, {transform_indices = @transform_1, window_bounds = array<i64: 2, 160>}, {transform_indices = @transform_2, window_bounds = array<i64: 2, 160>}]} {
    %c0 = arith.constant 0 : index
    %c0_0 = arith.constant 0 : index
    %0 = vector.load %arg2[%c0, %c0_0] : memref<2x160xf32, #tpu.memory_space<vmem>>, vector<2x160xf32>
    %c0_1 = arith.constant 0 : index
    %c0_2 = arith.constant 0 : index
    %1 = vector.load %arg1[%c0_1, %c0_2] : memref<1x160xf32, #tpu.memory_space<vmem>>, vector<1x160xf32>
    %2 = vector.broadcast %1 : vector<1x160xf32> to vector<2x160xf32>
    %3 = arith.addf %0, %2 : vector<2x160xf32>
    %c0_3 = arith.constant 0 : index
    %c0_4 = arith.constant 0 : index
    %4 = vector.load %arg3[%c0_3, %c0_4] : memref<2x160xf32, #tpu.memory_space<vmem>>, vector<2x160xf32>
    tpu.vector_store %arg3[%c0_3, %c0_4], %3 {strides = array<i32>} : memref<2x160xf32, #tpu.memory_space<vmem>>, vector<2x160xf32>,
    return
  }
  func.func @transform_0(%arg0: i32) -> (i32, i32) {
    %c0_i32 = arith.constant 0 : i32
    %c0_i32_0 = arith.constant 0 : i32
    %c0_i32_1 = arith.constant 0 : i32
    return %c0_i32, %c0_i32_0 : i32, i32
  }
  func.func @transform_1(%arg0: i32) -> (i32, i32) {
    %c0_i32 = arith.constant 0 : i32
    %c0_i32_0 = arith.constant 0 : i32
    return %arg0, %c0_i32 : i32, i32
  }
  func.func @transform_2(%arg0: i32) -> (i32, i32) {
    %c0_i32 = arith.constant 0 : i32
    %c0_i32_0 = arith.constant 0 : i32
    return %arg0, %c0_i32 : i32, i32
  }
}

</mosaic_0001>

<llo_original>
// kernel: tpu_custom_call.1
$region0: #{tpu_custom_call.1}
  #allocation0 [shape = 'u32[]', space=smem, size = 0x4, offset = 0x4, fixed_abs, tag = 'smem constant byte address 0x4 - core index']
  #allocation1 [shape = 'u32[144,128]{1,0:T(1,128)}', space=vmem, size = 0x12000, scoped, tag = 'internal scratch']
  %s0 = inlined_call_operand.vmem [shape: f32[1,160], index: 0, kind: input, shape index: {}]
  %s1 = inlined_call_operand.hbm [shape: f32[2,160], index: 1, kind: input, shape index: {}, may-alias: {1,2}]
  %s2 = inlined_call_operand.hbm [shape: f32[2,160], index: 2, kind: output, shape index: {}, may-alias: {1,2}]
  %s3 = sld [smem:[#allocation0]]
  $region22: #{tpu_custom_call.1} parent=0
    _
  %s5 = ssub.s32 1, %s3
  %s6 = scalar_select 0, %s5, %s3
  $region1: #{tpu_custom_call.1} parent=0
    #allocation2 [shape = 'u8[2048]{0}', space=vmem, size = 0x800, scoped, tag = 'input window, operand 1, single buffered']
    #allocation3 [shape = 's32[1]{0}', space=sflag, size = 0x4, scoped, tag = 'scoped memory for tpu_custom_call.1']
    #allocation4 [shape = 's32[1]{0}', space=sflag, size = 0x4, scoped, tag = 'scoped memory for tpu_custom_call.1']
    #allocation5 [shape = 'u8[2048]{0}', space=vmem, size = 0x800, scoped, tag = 'output window, operand 0, single buffered']
    %7 = vsyncpa [#allocation3], 0
    %8 = vsyncpa [#allocation4], 0
    // Predicated region
    $region2: #{tpu_custom_call.1} parent=1 // pred_check
      _
    $region3: #{tpu_custom_call.1} parent=1 // pred_check_branch
      %10 = sbr.rel (0) target = $region5
    $region4: #{tpu_custom_call.1} parent=1 // pred_region
      _
    $region5: #{tpu_custom_call.1} parent=1 // pred_fallthru
      _
    // Predicated region
    $region6: #{tpu_custom_call.1} parent=1 // pred_check
      _
    $region7: #{tpu_custom_call.1} parent=1 // pred_check_branch
      %12 = sbr.rel (0) target = $region9
    $region8: #{tpu_custom_call.1} parent=1 // pred_region
      %s14 = ssub.s32 64, 64
      %15 = vsyncadd [#allocation3], %s14
      %s17 = sshll.u32 [#allocation2], 4
      %s18 = int_to_ptr.vmem [resolvable:$true] %s17
      %20 = dma.hbm_to_vmem [thread:$0]  %s1, 64, %s18, [#allocation3]
    $region9: #{tpu_custom_call.1} parent=1 // pred_fallthru
      _
    // Predicated region
    $region10: #{tpu_custom_call.1} parent=1 // pred_check
      _
    $region11: #{tpu_custom_call.1} parent=1 // pred_check_branch
      %22 = sbr.rel (0) target = $region13
    $region12: #{tpu_custom_call.1} parent=1 // pred_region
      %23 = dma.done [#allocation3], 64
    $region13: #{tpu_custom_call.1} parent=1 // pred_fallthru
      _
    %v24 = vld [vmem:[#allocation2] sm:$0xf]
    %v25 = vld [vmem:[%s0] sm:$0x3]
    %v27 = vlaneseq
    %v28 = vshrl.u32 %v27, 7
    %v29 = vsub.s32 0, %v28
    %v30 = vrot.slane %v25, %v29
    %v31 = vlaneseq
    %v32 = vshrl.u32 %v31, 7
    %v33 = vsub.s32 1, %v32
    %v34 = vrot.slane %v25, %v33
    %v35 = vcombine.low %v30, %v34
    %v37 = vunpack.c.l.s4 1983009808
    %v38 = vunpack.c.0.s8 %v37
    %v39 = vlaneseq
    %v40 = vshrl.u32 %v39, 7
    %v41 = vsub.s32 %v38, %v40
    %v42 = vrot.slane %v35, %v41
    %v44 = vadd.f32 %v24, %v42
    %vm45 = vcmask 1041408
    %vm46 = vcmask 257026
    %vm47 = vmor %vm46, %vm45
    %48 = vst.msk [vmem:[#allocation5] sm:$0xf] %vm47, %v44
    // Predicated region
    $region14: #{tpu_custom_call.1} parent=1 // pred_check
      _
    $region15: #{tpu_custom_call.1} parent=1 // pred_check_branch
      %50 = sbr.rel (0) target = $region17
    $region16: #{tpu_custom_call.1} parent=1 // pred_region
      %s52 = ssub.s32 64, 64
      %53 = vsyncadd [#allocation4], %s52
      %s55 = sshll.u32 [#allocation5], 4
      %s56 = int_to_ptr.vmem [resolvable:$true] %s55
      %58 = dma.vmem_to_hbm [thread:$0]  %s56, 64, %s2, [#allocation4]
    $region17: #{tpu_custom_call.1} parent=1 // pred_fallthru
      _
    // Predicated region
    $region18: #{tpu_custom_call.1} parent=1 // pred_check
      _
    $region19: #{tpu_custom_call.1} parent=1 // pred_check_branch
      %60 = sbr.rel (0) target = $region21
    $region20: #{tpu_custom_call.1} parent=1 // pred_region
      %61 = dma.done [#allocation4], 64
    $region21: #{tpu_custom_call.1} parent=1 // pred_fallthru
      _
    %62 = vsyncpa [#allocation3], 1
    %63 = vsyncpa [#allocation4], 1

</llo_original>
